<compile_context>
chip_gen: v6e
topology: v6e:2x2x1
jax: 0.10.0
libtpu: 0.0.40
codegen_flags: <defaults>
</compile_context>

<pallas_src>
import functools
import numpy as np
import jax
import jax.numpy as jnp
from jax.experimental import pallas as pl
from jax.experimental.pallas import tpu as pltpu


# ----------------------------- Pallas kernel -----------------------------
def _act_block(h, negative_slope, activation):
    # LeakyReLU (valid for 0 < negative_slope < 1): one vmul + one vmax on the VPU.
    h = jnp.maximum(h, negative_slope * h)
    # TODO(synk): nn.Dropout is identity at inference; train-mode dropout (and
    # train-mode BatchNorm statistics) are not implemented.
    if activation == "tanh":
        h = jnp.tanh(h)                     # EUP slot, rides next to the VPU work
    elif activation == "relu":
        h = jnp.maximum(h, 0.0)
    # "identity": fall through
    return h


def mlp_kernel(x_ref, w1_ref, b1_ref, w2_ref, b2_ref, w3_ref, b3_ref,
               w4_ref, b4_ref, o_ref, *, negative_slope, activation):
    # Layer 1 (Linear + eval-mode BN folded) -> LeakyReLU -> activation
    h = jnp.dot(x_ref[...], w1_ref[...], preferred_element_type=jnp.float32) + b1_ref[...]
    h = _act_block(h, negative_slope, activation)
    # Layer 2
    h = jnp.dot(h.astype(w2_ref.dtype), w2_ref[...],
                preferred_element_type=jnp.float32) + b2_ref[...]
    h = _act_block(h, negative_slope, activation)
    # Layer 3
    h = jnp.dot(h.astype(w3_ref.dtype), w3_ref[...],
                preferred_element_type=jnp.float32) + b3_ref[...]
    h = _act_block(h, negative_slope, activation)
    # Output layer (no BN / no activation)
    out = jnp.dot(h.astype(w4_ref.dtype), w4_ref[...],
                  preferred_element_type=jnp.float32) + b4_ref[...]
    o_ref[...] = out.astype(o_ref.dtype)


# ----------------------------- host-side folding & wrapper -----------------------------
def _round_up(v, m):
    return ((v + m - 1) // m) * m


def fold_linear_bn(w, b, gamma, beta, mean, var, eps=1e-5):
    """Fold eval-mode BatchNorm1d into the preceding Linear.

    w: (out, in) PyTorch layout, b: (out,). Returns W' (in, out) and b' (1, out)
    such that  BN(x @ w.T + b) == x @ W' + b'.
    """
    scale = gamma / jnp.sqrt(var + eps)
    w_f = (w * scale[:, None]).T                      # (in, out)
    b_f = (b - mean) * scale + beta                   # (out,)
    return w_f.astype(jnp.float32), b_f.reshape(1, -1).astype(jnp.float32)


# VMEM planning: stay well inside v7x's 64 MiB physical VMEM while raising the
# scoped limit above v5e's 16 MiB / v6e-v7x's 32 MiB defaults.
_VMEM_TILE_BUDGET = 40 * 1024 * 1024
_VMEM_LIMIT_BYTES = 64 * 1024 * 1024


def _vmem_bytes(tb, d, h1, h2, h3, out_pad, in_bytes):
    x_buf = 2 * tb * d * in_bytes                                   # double-buffered x tile
    out_buf = 2 * tb * out_pad * 4                                  # double-buffered f32 out tile
    w = (d * h1 + h1 * h2 + h2 * h3 + h3 * out_pad) * in_bytes      # single-buffered weights
    bias = (h1 + h2 + h3 + out_pad) * 4
    act = 2 * tb * max(h1, h2, h3, out_pad) * 4                     # live f32 intermediates
    return x_buf + out_buf + w + bias + act


def _param_spec(shape):
    """Grid-invariant parameter block: never re-DMA'd, so single-buffer it."""
    full = lambda i: (0, 0)
    if hasattr(pl, "Buffered"):
        try:
            return pl.BlockSpec(shape, full, pipeline_mode=pl.Buffered(1))
        except TypeError:  # older jax without pipeline_mode kwarg
            pass
    return pl.BlockSpec(shape, full)


def mlp_forward(x, params, *, negative_slope=0.01, activation="tanh",
                block_b=512, use_bf16=True):
    """x: (B, C, L). params: 4 pairs of (W (in,out) f32, b (1,out) f32), BN pre-folded."""
    B = x.shape[0]
    D = int(np.prod(x.shape[1:]))
    (w1, b1), (w2, b2), (w3, b3), (w4, b4) = params
    out_dim = w4.shape[1]
    h1, h2, h3 = w1.shape[1], w2.shape[1], w3.shape[1]

    cdt = jnp.bfloat16 if use_bf16 else jnp.float32
    in_bytes = jnp.dtype(cdt).itemsize

    # Lane-dense K for the first matmul: pad D to a multiple of 128 (zero rows in w1).
    d_pad = _round_up(D, 128)
    # Lane-dense output: pad the final feature dim to a multiple of 128 (unmasked vst).
    out_pad = _round_up(out_dim, 128)
    if d_pad != D:
        w1 = jnp.pad(w1, ((0, d_pad - D), (0, 0)))
    if out_pad != out_dim:
        w4 = jnp.pad(w4, ((0, 0), (0, out_pad - out_dim)))
        b4 = jnp.pad(b4, ((0, 0), (0, out_pad - out_dim)))

    # ---- batch tile selection ------------------------------------------------
    b_base = _round_up(max(B, 8), 8)                     # sublane granule
    tb = min(_round_up(block_b, 8), b_base)
    # Cap by VMEM so the tile fits v7x's 64 MiB physical budget with headroom.
    # TODO(synk): if D grows into the tens of thousands, split layer 1 over a K
    # grid axis with an f32 accumulator instead of shrinking tb here.
    while tb > 8 and _vmem_bytes(tb, d_pad, h1, h2, h3, out_pad, in_bytes) > _VMEM_TILE_BUDGET:
        tb = _round_up(tb // 2, 8)
    # v7x megacore: ensure >= 2 grid steps on the "parallel" batch axis when the
    # batch is big enough, so both TensorCores get work.
    if tb >= b_base and b_base >= 16:
        tb = _round_up(b_base // 2, 8)
    b_pad = _round_up(b_base, tb)
    grid_b = b_pad // tb

    # ---- host-side prep: one cast + (at most) one pad of the activations -----
    x2d = x.reshape(B, D).astype(cdt)                    # nn.Flatten() + MXU dtype
    if b_pad != B or d_pad != D:
        x2d = jnp.pad(x2d, ((0, b_pad - B), (0, d_pad - D)))
    w1, w2, w3, w4 = (w.astype(cdt) for w in (w1, w2, w3, w4))

    kern = functools.partial(mlp_kernel, negative_slope=negative_slope,
                             activation=activation)

    flops = 2 * b_pad * (d_pad * h1 + h1 * h2 + h2 * h3 + h3 * out_pad)
    transc = b_pad * (h1 + h2 + h3) if activation == "tanh" else 0
    bytes_accessed = ((b_pad * d_pad + d_pad * h1 + h1 * h2 + h2 * h3 + h3 * out_pad) * in_bytes
                      + (h1 + h2 + h3 + out_pad) * 4 + b_pad * out_pad * 4)

    out = pl.pallas_call(
        kern,
        out_shape=jax.ShapeDtypeStruct((b_pad, out_pad), jnp.float32),
        grid=(grid_b,),
        in_specs=[
            pl.BlockSpec((tb, d_pad), lambda i: (i, 0)),
            _param_spec((d_pad, h1)),   _param_spec((1, h1)),
            _param_spec((h1, h2)),      _param_spec((1, h2)),
            _param_spec((h2, h3)),      _param_spec((1, h3)),
            _param_spec((h3, out_pad)), _param_spec((1, out_pad)),
        ],
        out_specs=pl.BlockSpec((tb, out_pad), lambda i: (i, 0)),
        compiler_params=pltpu.CompilerParams(
            dimension_semantics=("parallel",),
            vmem_limit_bytes=_VMEM_LIMIT_BYTES),
        cost_estimate=pl.CostEstimate(flops=int(flops),
                                      transcendentals=int(transc),
                                      bytes_accessed=int(bytes_accessed)),
    )(x2d, w1, b1, w2, b2, w3, b3, w4, b4)

    out = out[:B, :out_dim]
    # forward() ends with .unsqueeze(2).unsqueeze(3)
    return out[:, :, None, None]


# ----------------------------- demo / correctness check -----------------------------
if __name__ == "__main__":
    # Hyper-parameters (hyperparams.* of the reference module), small but lane-friendly.
    n_channel, input_size = 4, 16                     # input x: (B, n_channel, input_size)
    n_conv_in, n_conv_in2, n_conv_in3 = 128, 128, 128
    output_size = 8
    negative_slope = 0.01
    dropout_p = 0.25                                  # identity at inference
    activation = "tanh"   # TODO(synk): hyperparams.activation is user-supplied; tanh assumed here.
    B = 2
    eps = 1e-5

    key = jax.random.PRNGKey(0)
    keys = jax.random.split(key, 16)
    kit = iter(keys)

    x = jax.random.normal(next(kit), (B, n_channel, input_size), dtype=jnp.float32)

    def linear_params(k, fan_in, fan_out):
        kw, kb = jax.random.split(k)
        bound = 1.0 / np.sqrt(fan_in)
        w = jax.random.uniform(kw, (fan_out, fan_in), minval=-bound, maxval=bound,
                               dtype=jnp.float32)
        b = jax.random.uniform(kb, (fan_out,), minval=-bound, maxval=bound,
                               dtype=jnp.float32)
        return w, b

    def bn_params(k, n):
        k1, k2, k3, k4 = jax.random.split(k, 4)
        gamma = jax.random.uniform(k1, (n,), minval=0.5, maxval=1.5, dtype=jnp.float32)
        beta = 0.1 * jax.random.normal(k2, (n,), dtype=jnp.float32)
        mean = 0.1 * jax.random.normal(k3, (n,), dtype=jnp.float32)
        var = jax.random.uniform(k4, (n,), minval=0.5, maxval=1.5, dtype=jnp.float32)
        return gamma, beta, mean, var

    dims = [n_channel * input_size, n_conv_in, n_conv_in2, n_conv_in3, output_size]
    lin = [linear_params(next(kit), dims[i], dims[i + 1]) for i in range(4)]
    bns = [bn_params(next(kit), dims[i + 1]) for i in range(3)]

    # Fold eval-mode BatchNorm1d into the first three Linear layers.
    params = [fold_linear_bn(lin[i][0], lin[i][1], *bns[i], eps=eps) for i in range(3)]
    params.append((lin[3][0].T.astype(jnp.float32),
                   lin[3][1].reshape(1, -1).astype(jnp.float32)))

    # f32 path (tight check) and bf16 path (fast path, looser tolerance).
    out_f32 = jax.block_until_ready(
        mlp_forward(x, params, negative_slope=negative_slope,
                    activation=activation, use_bf16=False))
    out_bf16 = jax.block_until_ready(
        mlp_forward(x, params, negative_slope=negative_slope,
                    activation=activation, use_bf16=True))

    # ---- float64 numpy reference (eval mode: BN running stats, Dropout identity) ----
    h = np.asarray(x, dtype=np.float64).reshape(B, -1)
    for i in range(3):
        w = np.asarray(lin[i][0], dtype=np.float64)
        b = np.asarray(lin[i][1], dtype=np.float64)
        g, bt, m, v = (np.asarray(a, dtype=np.float64) for a in bns[i])
        z = h @ w.T + b
        z = g * (z - m) / np.sqrt(v + eps) + bt
        z = np.where(z >= 0, z, negative_slope * z)   # LeakyReLU
        z = np.tanh(z)                                # hyperparams.activation
        h = z
    w = np.asarray(lin[3][0], dtype=np.float64)
    b = np.asarray(lin[3][1], dtype=np.float64)
    ref = (h @ w.T + b)[:, :, None, None]

    assert out_f32.shape == out_bf16.shape == ref.shape == (B, output_size, 1, 1)
    np.testing.assert_allclose(np.asarray(out_f32, dtype=np.float64), ref,
                               rtol=1e-3, atol=1e-3)
    np.testing.assert_allclose(np.asarray(out_bf16, dtype=np.float64), ref,
                               rtol=6e-2, atol=6e-2)
    print("KERNEL_OK")
</pallas_src>

<mosaic_0001>
module attributes {stable_mosaic.version = 11 : i64} {
  func.func @mlp_kernel(%arg0: i32, %arg1: memref<8x128xf32, #tpu.memory_space<vmem>>, %arg2: memref<128x128xf32, #tpu.memory_space<vmem>>, %arg3: memref<1x128xf32, #tpu.memory_space<vmem>>, %arg4: memref<128x128xf32, #tpu.memory_space<vmem>>, %arg5: memref<1x128xf32, #tpu.memory_space<vmem>>, %arg6: memref<128x128xf32, #tpu.memory_space<vmem>>, %arg7: memref<1x128xf32, #tpu.memory_space<vmem>>, %arg8: memref<128x128xf32, #tpu.memory_space<vmem>>, %arg9: memref<1x128xf32, #tpu.memory_space<vmem>>, %arg10: memref<8x128xf32, #tpu.memory_space<vmem>>) attributes {dimension_semantics = [#tpu.dimension_semantics<parallel>], iteration_bounds = array<i64: 1>, scalar_prefetch = 0 : i64, scratch_operands = 0 : i64, tpu.core_type = #tpu.core_type<tc>, window_params = [{transform_indices = @transform_0, window_bounds = array<i64: 8, 128>}, {pipeline_mode = #tpu.pipeline_mode<synchronous>, transform_indices = @transform_1, window_bounds = array<i64: 128, 128>}, {pipeline_mode = #tpu.pipeline_mode<synchronous>, transform_indices = @transform_2, window_bounds = array<i64: 1, 128>}, {pipeline_mode = #tpu.pipeline_mode<synchronous>, transform_indices = @transform_3, window_bounds = array<i64: 128, 128>}, {pipeline_mode = #tpu.pipeline_mode<synchronous>, transform_indices = @transform_4, window_bounds = array<i64: 1, 128>}, {pipeline_mode = #tpu.pipeline_mode<synchronous>, transform_indices = @transform_5, window_bounds = array<i64: 128, 128>}, {pipeline_mode = #tpu.pipeline_mode<synchronous>, transform_indices = @transform_6, window_bounds = array<i64: 1, 128>}, {pipeline_mode = #tpu.pipeline_mode<synchronous>, transform_indices = @transform_7, window_bounds = array<i64: 128, 128>}, {pipeline_mode = #tpu.pipeline_mode<synchronous>, transform_indices = @transform_8, window_bounds = array<i64: 1, 128>}, {transform_indices = @transform_9, window_bounds = array<i64: 8, 128>}]} {
    %c0 = arith.constant 0 : index
    %c0_0 = arith.constant 0 : index
    %0 = vector.load %arg1[%c0, %c0_0] : memref<8x128xf32, #tpu.memory_space<vmem>>, vector<8x128xf32>
    %c0_1 = arith.constant 0 : index
    %c0_2 = arith.constant 0 : index
    %1 = vector.load %arg2[%c0_1, %c0_2] : memref<128x128xf32, #tpu.memory_space<vmem>>, vector<128x128xf32>
    %cst = arith.constant dense<0.000000e+00> : vector<8x128xf32>
    %2 = tpu.matmul %0, %1, %cst {dimension_numbers = #tpu.dot_dimension_numbers<[1], [0], [0], [1], [0, 0, 1, 1], [], []>} : vector<8x128xf32>, vector<128x128xf32>, vector<8x128xf32> -> vector<8x128xf32>
    %c0_3 = arith.constant 0 : index
    %c0_4 = arith.constant 0 : index
    %3 = vector.load %arg3[%c0_3, %c0_4] : memref<1x128xf32, #tpu.memory_space<vmem>>, vector<1x128xf32>
    %4 = vector.broadcast %3 : vector<1x128xf32> to vector<8x128xf32>
    %5 = arith.addf %2, %4 : vector<8x128xf32>
    %cst_5 = arith.constant 0.00999999977 : f32
    %6 = vector.broadcast %cst_5 : f32 to vector<8x128xf32>
    %7 = arith.mulf %6, %5 : vector<8x128xf32>
    %8 = arith.maximumf %5, %7 : vector<8x128xf32>
    %9 = math.tanh %8 : vector<8x128xf32>
    %c0_6 = arith.constant 0 : index
    %c0_7 = arith.constant 0 : index
    %10 = vector.load %arg4[%c0_6, %c0_7] : memref<128x128xf32, #tpu.memory_space<vmem>>, vector<128x128xf32>
    %cst_8 = arith.constant dense<0.000000e+00> : vector<8x128xf32>
    %11 = tpu.matmul %9, %10, %cst_8 {dimension_numbers = #tpu.dot_dimension_numbers<[1], [0], [0], [1], [0, 0, 1, 1], [], []>} : vector<8x128xf32>, vector<128x128xf32>, vector<8x128xf32> -> vector<8x128xf32>
    %c0_9 = arith.constant 0 : index
    %c0_10 = arith.constant 0 : index
    %12 = vector.load %arg5[%c0_9, %c0_10] : memref<1x128xf32, #tpu.memory_space<vmem>>, vector<1x128xf32>
    %13 = vector.broadcast %12 : vector<1x128xf32> to vector<8x128xf32>
    %14 = arith.addf %11, %13 : vector<8x128xf32>
    %cst_11 = arith.constant 0.00999999977 : f32
    %15 = vector.broadcast %cst_11 : f32 to vector<8x128xf32>
    %16 = arith.mulf %15, %14 : vector<8x128xf32>
    %17 = arith.maximumf %14, %16 : vector<8x128xf32>
    %18 = math.tanh %17 : vector<8x128xf32>
    %c0_12 = arith.constant 0 : index
    %c0_13 = arith.constant 0 : index
    %19 = vector.load %arg6[%c0_12, %c0_13] : memref<128x128xf32, #tpu.memory_space<vmem>>, vector<128x128xf32>
    %cst_14 = arith.constant dense<0.000000e+00> : vector<8x128xf32>
    %20 = tpu.matmul %18, %19, %cst_14 {dimension_numbers = #tpu.dot_dimension_numbers<[1], [0], [0], [1], [0, 0, 1, 1], [], []>} : vector<8x128xf32>, vector<128x128xf32>, vector<8x128xf32> -> vector<8x128xf32>
    %c0_15 = arith.constant 0 : index
    %c0_16 = arith.constant 0 : index
    %21 = vector.load %arg7[%c0_15, %c0_16] : memref<1x128xf32, #tpu.memory_space<vmem>>, vector<1x128xf32>
    %22 = vector.broadcast %21 : vector<1x128xf32> to vector<8x128xf32>
    %23 = arith.addf %20, %22 : vector<8x128xf32>
    %cst_17 = arith.constant 0.00999999977 : f32
    %24 = vector.broadcast %cst_17 : f32 to vector<8x128xf32>
    %25 = arith.mulf %24, %23 : vector<8x128xf32>
    %26 = arith.maximumf %23, %25 : vector<8x128xf32>
    %27 = math.tanh %26 : vector<8x128xf32>
    %c0_18 = arith.constant 0 : index
    %c0_19 = arith.constant 0 : index
    %28 = vector.load %arg8[%c0_18, %c0_19] : memref<128x128xf32, #tpu.memory_space<vmem>>, vector<128x128xf32>
    %cst_20 = arith.constant dense<0.000000e+00> : vector<8x128xf32>
    %29 = tpu.matmul %27, %28, %cst_20 {dimension_numbers = #tpu.dot_dimension_numbers<[1], [0], [0], [1], [0, 0, 1, 1], [], []>} : vector<8x128xf32>, vector<128x128xf32>, vector<8x128xf32> -> vector<8x128xf32>
    %c0_21 = arith.constant 0 : index
    %c0_22 = arith.constant 0 : index
    %30 = vector.load %arg9[%c0_21, %c0_22] : memref<1x128xf32, #tpu.memory_space<vmem>>, vector<1x128xf32>
    %31 = vector.broadcast %30 : vector<1x128xf32> to vector<8x128xf32>
    %32 = arith.addf %29, %31 : vector<8x128xf32>
    %c0_23 = arith.constant 0 : index
    %c0_24 = arith.constant 0 : index
    %33 = vector.load %arg10[%c0_23, %c0_24] : memref<8x128xf32, #tpu.memory_space<vmem>>, vector<8x128xf32>
    tpu.vector_store %arg10[%c0_23, %c0_24], %32 {strides = array<i32>} : memref<8x128xf32, #tpu.memory_space<vmem>>, vector<8x128xf32>,
    return
  }
  func.func @transform_0(%arg0: i32) -> (i32, i32) {
    %c0_i32 = arith.constant 0 : i32
    %c0_i32_0 = arith.constant 0 : i32
    return %arg0, %c0_i32 : i32, i32
  }
  func.func @transform_1(%arg0: i32) -> (i32, i32) {
    %c0_i32 = arith.constant 0 : i32
    %c0_i32_0 = arith.constant 0 : i32
    %c0_i32_1 = arith.constant 0 : i32
    return %c0_i32, %c0_i32_0 : i32, i32
  }
  func.func @transform_2(%arg0: i32) -> (i32, i32) {
    %c0_i32 = arith.constant 0 : i32
    %c0_i32_0 = arith.constant 0 : i32
    %c0_i32_1 = arith.constant 0 : i32
    return %c0_i32, %c0_i32_0 : i32, i32
  }
  func.func @transform_3(%arg0: i32) -> (i32, i32) {
    %c0_i32 = arith.constant 0 : i32
    %c0_i32_0 = arith.constant 0 : i32
    %c0_i32_1 = arith.constant 0 : i32
    return %c0_i32, %c0_i32_0 : i32, i32
  }
  func.func @transform_4(%arg0: i32) -> (i32, i32) {
    %c0_i32 = arith.constant 0 : i32
    %c0_i32_0 = arith.constant 0 : i32
    %c0_i32_1 = arith.constant 0 : i32
    return %c0_i32, %c0_i32_0 : i32, i32
  }
  func.func @transform_5(%arg0: i32) -> (i32, i32) {
    %c0_i32 = arith.constant 0 : i32
    %c0_i32_0 = arith.constant 0 : i32
    %c0_i32_1 = arith.constant 0 : i32
    return %c0_i32, %c0_i32_0 : i32, i32
  }
  func.func @transform_6(%arg0: i32) -> (i32, i32) {
    %c0_i32 = arith.constant 0 : i32
    %c0_i32_0 = arith.constant 0 : i32
    %c0_i32_1 = arith.constant 0 : i32
    return %c0_i32, %c0_i32_0 : i32, i32
  }
  func.func @transform_7(%arg0: i32) -> (i32, i32) {
    %c0_i32 = arith.constant 0 : i32
    %c0_i32_0 = arith.constant 0 : i32
    %c0_i32_1 = arith.constant 0 : i32
    return %c0_i32, %c0_i32_0 : i32, i32
  }
  func.func @transform_8(%arg0: i32) -> (i32, i32) {
    %c0_i32 = arith.constant 0 : i32
    %c0_i32_0 = arith.constant 0 : i32
    %c0_i32_1 = arith.constant 0 : i32
    return %c0_i32, %c0_i32_0 : i32, i32
  }
  func.func @transform_9(%arg0: i32) -> (i32, i32) {
    %c0_i32 = arith.constant 0 : i32
    %c0_i32_0 = arith.constant 0 : i32
    return %arg0, %c0_i32 : i32, i32
  }
}

</mosaic_0001>

<llo_original>
// kernel: tpu_custom_call.1
$region0: #{tpu_custom_call.1}
  #allocation0 [shape = 'u32[]', space=smem, size = 0x4, offset = 0x4, fixed_abs, tag = 'smem constant byte address 0x4 - core index']
  #allocation1 [shape = 'u32[144,128]{1,0:T(1,128)}', space=vmem, size = 0x12000, scoped, tag = 'internal scratch']
  %s0 = inlined_call_operand.hbm [shape: f32[8,128], index: 0, kind: input, shape index: {}]
  %s1 = inlined_call_operand.hbm [shape: f32[128,128], index: 1, kind: input, shape index: {}]
  %s2 = inlined_call_operand.vmem [shape: f32[1,128], index: 2, kind: input, shape index: {}]
  %s3 = inlined_call_operand.hbm [shape: f32[128,128], index: 3, kind: input, shape index: {}]
  %s4 = inlined_call_operand.vmem [shape: f32[1,128], index: 4, kind: input, shape index: {}]
  %s5 = inlined_call_operand.hbm [shape: f32[128,128], index: 5, kind: input, shape index: {}]
  %s6 = inlined_call_operand.vmem [shape: f32[1,128], index: 6, kind: input, shape index: {}]
  %s7 = inlined_call_operand.hbm [shape: f32[128,128], index: 7, kind: input, shape index: {}]
  %s8 = inlined_call_operand.vmem [shape: f32[1,128], index: 8, kind: input, shape index: {}]
  %s9 = inlined_call_operand.hbm [shape: f32[8,128], index: 9, kind: output, shape index: {}]
  %s10 = sld [smem:[#allocation0]]
  $region66: #{tpu_custom_call.1} parent=0
    _
  %s12 = ssub.s32 1, %s10
  %s13 = scalar_select 0, %s12, %s10
  $region1: #{tpu_custom_call.1} parent=0
    #allocation2 [shape = 'u8[4096]{0}', space=vmem, size = 0x1000, scoped, tag = 'input window, operand 0, single buffered']
    #allocation3 [shape = 's32[1]{0}', space=sflag, size = 0x4, scoped, tag = 'scoped memory for tpu_custom_call.1']
    #allocation4 [shape = 's32[1]{0}', space=sflag, size = 0x4, scoped, tag = 'scoped memory for tpu_custom_call.1']
    #allocation5 [shape = 'u8[65536]{0}', space=vmem, size = 0x10000, scoped, tag = 'input window, operand 1, single buffered']
    #allocation6 [shape = 's32[1]{0}', space=sflag, size = 0x4, scoped, tag = 'scoped memory for tpu_custom_call.1']
    #allocation7 [shape = 'u8[65536]{0}', space=vmem, size = 0x10000, scoped, tag = 'input window, operand 3, single buffered']
    #allocation8 [shape = 'u8[65536]{0}', space=vmem, size = 0x10000, scoped, tag = 'input window, operand 5, single buffered']
    #allocation9 [shape = 's32[1]{0}', space=sflag, size = 0x4, scoped, tag = 'scoped memory for tpu_custom_call.1']
    #allocation10 [shape = 'u8[65536]{0}', space=vmem, size = 0x10000, scoped, tag = 'input window, operand 7, single buffered']
    #allocation11 [shape = 'u8[4096]{0}', space=vmem, size = 0x1000, scoped, tag = 'output window, operand 0, single buffered']
    %14 = vsyncpa [#allocation3], 0
    %15 = vsyncpa [#allocation6], 0
    %16 = vsyncpa [#allocation9], 0
    %17 = vsyncpa [#allocation4], 0
    // Predicated region
    $region2: #{tpu_custom_call.1} parent=1 // pred_check
      _
    $region3: #{tpu_custom_call.1} parent=1 // pred_check_branch
      %19 = sbr.rel (0) target = $region5
    $region4: #{tpu_custom_call.1} parent=1 // pred_region
      %s21 = ssub.s32 128, 128
      %22 = vsyncadd [#allocation3], %s21
      %s24 = sshll.u32 [#allocation2], 4
      %s25 = int_to_ptr.vmem [resolvable:$true] %s24
      %27 = dma.hbm_to_vmem [thread:$0]  %s0, 128, %s25, [#allocation3]
    $region5: #{tpu_custom_call.1} parent=1 // pred_fallthru
      _
    // Predicated region
    $region6: #{tpu_custom_call.1} parent=1 // pred_check
      _
    $region7: #{tpu_custom_call.1} parent=1 // pred_check_branch
      %29 = sbr.rel (0) target = $region9
    $region8: #{tpu_custom_call.1} parent=1 // pred_region
      %s31 = ssub.s32 2048, 2048
      %32 = vsyncadd [#allocation6], %s31
      %s33 = sshll.u32 [#allocation5], 4
      %s34 = int_to_ptr.vmem [resolvable:$true] %s33
      %39 = dma.hbm_to_vmem [thread:$0]  %s1, 2048, %s34, [#allocation6], 128, 128, 8
    $region9: #{tpu_custom_call.1} parent=1 // pred_fallthru
      _
    // Predicated region
    $region10: #{tpu_custom_call.1} parent=1 // pred_check
      _
    $region11: #{tpu_custom_call.1} parent=1 // pred_check_branch
      %41 = sbr.rel (0) target = $region13
    $region12: #{tpu_custom_call.1} parent=1 // pred_region
      _
    $region13: #{tpu_custom_call.1} parent=1 // pred_fallthru
      _
    // Predicated region
    $region14: #{tpu_custom_call.1} parent=1 // pred_check
      _
    $region15: #{tpu_custom_call.1} parent=1 // pred_check_branch
      %43 = sbr.rel (0) target = $region17
    $region16: #{tpu_custom_call.1} parent=1 // pred_region
      %s45 = ssub.s32 2048, 2048
      %46 = vsyncadd [#allocation6], %s45
      %s47 = sshll.u32 [#allocation7], 4
      %s48 = int_to_ptr.vmem [resolvable:$true] %s47
      %53 = dma.hbm_to_vmem [thread:$0]  %s3, 2048, %s48, [#allocation6], 128, 128, 8
    $region17: #{tpu_custom_call.1} parent=1 // pred_fallthru
      _
    // Predicated region
    $region18: #{tpu_custom_call.1} parent=1 // pred_check
      _
    $region19: #{tpu_custom_call.1} parent=1 // pred_check_branch
      %55 = sbr.rel (0) target = $region21
    $region20: #{tpu_custom_call.1} parent=1 // pred_region
      _
    $region21: #{tpu_custom_call.1} parent=1 // pred_fallthru
      _
    // Predicated region
    $region22: #{tpu_custom_call.1} parent=1 // pred_check
      _
    $region23: #{tpu_custom_call.1} parent=1 // pred_check_branch
      %57 = sbr.rel (0) target = $region25
    $region24: #{tpu_custom_call.1} parent=1 // pred_region
      %s59 = ssub.s32 2048, 2048
      %60 = vsyncadd [#allocation9], %s59
      %s61 = sshll.u32 [#allocation8], 4
      %s62 = int_to_ptr.vmem [resolvable:$true] %s61
      %67 = dma.hbm_to_vmem [thread:$0]  %s5, 2048, %s62, [#allocation9], 128, 128, 8
    $region25: #{tpu_custom_call.1} parent=1 // pred_fallthru
      _
    // Predicated region
    $region26: #{tpu_custom_call.1} parent=1 // pred_check
      _
    $region27: #{tpu_custom_call.1} parent=1 // pred_check_branch
      %69 = sbr.rel (0) target = $region29
    $region28: #{tpu_custom_call.1} parent=1 // pred_region
      _
    $region29: #{tpu_custom_call.1} parent=1 // pred_fallthru
      _
    // Predicated region
    $region30: #{tpu_custom_call.1} parent=1 // pred_check
      _
    $region31: #{tpu_custom_call.1} parent=1 // pred_check_branch
      %71 = sbr.rel (0) target = $region33
    $region32: #{tpu_custom_call.1} parent=1 // pred_region
      %s73 = ssub.s32 2048, 2048
      %74 = vsyncadd [#allocation9], %s73
      %s75 = sshll.u32 [#allocation10], 4
      %s76 = int_to_ptr.vmem [resolvable:$true] %s75
      %81 = dma.hbm_to_vmem [thread:$0]  %s7, 2048, %s76, [#allocation9], 128, 128, 8
    $region33: #{tpu_custom_call.1} parent=1 // pred_fallthru
      _
    // Predicated region
    $region34: #{tpu_custom_call.1} parent=1 // pred_check
      _
    $region35: #{tpu_custom_call.1} parent=1 // pred_check_branch
      %83 = sbr.rel (0) target = $region37
    $region36: #{tpu_custom_call.1} parent=1 // pred_region
      _
    $region37: #{tpu_custom_call.1} parent=1 // pred_fallthru
      _
    // Predicated region
    $region38: #{tpu_custom_call.1} parent=1 // pred_check
      _
    $region39: #{tpu_custom_call.1} parent=1 // pred_check_branch
      %85 = sbr.rel (0) target = $region41
    $region40: #{tpu_custom_call.1} parent=1 // pred_region
      %86 = dma.done [#allocation3], 128
    $region41: #{tpu_custom_call.1} parent=1 // pred_fallthru
      _
    // Predicated region
    $region42: #{tpu_custom_call.1} parent=1 // pred_check
      _
    $region43: #{tpu_custom_call.1} parent=1 // pred_check_branch
      %88 = sbr.rel (0) target = $region45
    $region44: #{tpu_custom_call.1} parent=1 // pred_region
      %89 = dma.done [#allocation6], 2048
    $region45: #{tpu_custom_call.1} parent=1 // pred_fallthru
      _
    // Predicated region
    $region46: #{tpu_custom_call.1} parent=1 // pred_check
      _
    $region47: #{tpu_custom_call.1} parent=1 // pred_check_branch
      %91 = sbr.rel (0) target = $region49
    $region48: #{tpu_custom_call.1} parent=1 // pred_region
      %92 = dma.done [#allocation6], 2048
    $region49: #{tpu_custom_call.1} parent=1 // pred_fallthru
      _
    // Predicated region
    $region50: #{tpu_custom_call.1} parent=1 // pred_check
      _
    $region51: #{tpu_custom_call.1} parent=1 // pred_check_branch
      %94 = sbr.rel (0) target = $region53
    $region52: #{tpu_custom_call.1} parent=1 // pred_region
      %95 = dma.done [#allocation9], 2048
    $region53: #{tpu_custom_call.1} parent=1 // pred_fallthru
      _
    // Predicated region
    $region54: #{tpu_custom_call.1} parent=1 // pred_check
      _
    $region55: #{tpu_custom_call.1} parent=1 // pred_check_branch
      %97 = sbr.rel (0) target = $region57
    $region56: #{tpu_custom_call.1} parent=1 // pred_region
      %98 = dma.done [#allocation9], 2048
    $region57: #{tpu_custom_call.1} parent=1 // pred_fallthru
      _
    %v99 = vld [vmem:[#allocation2] sm:$0xff]
    %v100 = vld [vmem:[#allocation5] sm:$0xff]
    %v101 = vld [vmem:[#allocation5 + $0x8] sm:$0xff]
    %v102 = vld [vmem:[#allocation5 + $0x10] sm:$0xff]
    %v103 = vld [vmem:[#allocation5 + $0x18] sm:$0xff]
    %v104 = vld [vmem:[#allocation5 + $0x20] sm:$0xff]
    %v105 = vld [vmem:[#allocation5 + $0x28] sm:$0xff]
    %v106 = vld [vmem:[#allocation5 + $0x30] sm:$0xff]
    %v107 = vld [vmem:[#allocation5 + $0x38] sm:$0xff]
    %v108 = vld [vmem:[#allocation5 + $0x40] sm:$0xff]
    %v109 = vld [vmem:[#allocation5 + $0x48] sm:$0xff]
    %v110 = vld [vmem:[#allocation5 + $0x50] sm:$0xff]
    %v111 = vld [vmem:[#allocation5 + $0x58] sm:$0xff]
    %v112 = vld [vmem:[#allocation5 + $0x60] sm:$0xff]
    %v113 = vld [vmem:[#allocation5 + $0x68] sm:$0xff]
    %v114 = vld [vmem:[#allocation5 + $0x70] sm:$0xff]
    %v115 = vld [vmem:[#allocation5 + $0x78] sm:$0xff]
    %v116 = vld [vmem:[%s2] sm:$0x1]
    %v118 = vlaneseq
    %v119 = vshrl.u32 %v118, 7
    %v120 = vsub.s32 0, %v119
    %v121 = vrot.slane %v116, %v120
    %123 = vmatprep.subr.mxu0 0.0
    %124 = vmatpush1.msra.mxu0 %v115
    %125 = vmatprep.subr.mxu0 0.0
    %126 = vmatpush1.msra.mxu0 %v114
    %127 = vmatprep.subr.mxu0 0.0
    %128 = vmatpush1.msra.mxu0 %v113
    %129 = vmatprep.subr.mxu0 0.0
    %130 = vmatpush1.msra.mxu0 %v112
    %131 = vmatprep.subr.mxu0 0.0
    %132 = vmatpush1.msra.mxu0 %v111
    %133 = vmatprep.subr.mxu0 0.0
    %134 = vmatpush1.msra.mxu0 %v110
    %135 = vmatprep.subr.mxu0 0.0
    %136 = vmatpush1.msra.mxu0 %v109
    %137 = vmatprep.subr.mxu0 0.0
    %138 = vmatpush1.msra.mxu0 %v108
    %139 = vmatprep.subr.mxu0 0.0
    %140 = vmatpush1.msra.mxu0 %v107
    %141 = vmatprep.subr.mxu0 0.0
    %142 = vmatpush1.msra.mxu0 %v106
    %143 = vmatprep.subr.mxu0 0.0
    %144 = vmatpush1.msra.mxu0 %v105
    %145 = vmatprep.subr.mxu0 0.0
    %146 = vmatpush1.msra.mxu0 %v104
    %147 = vmatprep.subr.mxu0 0.0
    %148 = vmatpush1.msra.mxu0 %v103
    %149 = vmatprep.subr.mxu0 0.0
    %150 = vmatpush1.msra.mxu0 %v102
    %151 = vmatprep.subr.mxu0 0.0
    %152 = vmatpush1.msra.mxu0 %v101
    %153 = vmatprep.subr.mxu0 0.0
    %154 = vmatpush1.msra.mxu0 %v100
    %155 = vmatprep.subr.mxu0 0.0
    %156 = vmatpush2.msra.mxu0 0.0
    %157 = vmatprep.subr.mxu0 0.0
    %158 = vmatpush2.msra.mxu0 0.0
    %159 = vmatprep.subr.mxu0 0.0
    %160 = vmatpush2.msra.mxu0 0.0
    %161 = vmatprep.subr.mxu0 0.0
    %162 = vmatpush2.msra.mxu0 0.0
    %163 = vmatprep.subr.mxu0 0.0
    %164 = vmatpush2.msra.mxu0 0.0
    %165 = vmatprep.subr.mxu0 0.0
    %166 = vmatpush2.msra.mxu0 0.0
    %167 = vmatprep.subr.mxu0 0.0
    %168 = vmatpush2.msra.mxu0 0.0
    %169 = vmatprep.subr.mxu0 0.0
    %170 = vmatpush2.msra.mxu0 0.0
    %171 = vmatprep.subr.mxu0 0.0
    %172 = vmatpush2.msra.mxu0 0.0
    %173 = vmatprep.subr.mxu0 0.0
    %174 = vmatpush2.msra.mxu0 0.0
    %175 = vmatprep.subr.mxu0 0.0
    %176 = vmatpush2.msra.mxu0 0.0
    %177 = vmatprep.subr.mxu0 0.0
    %178 = vmatpush2.msra.mxu0 0.0
    %179 = vmatprep.subr.mxu0 0.0
    %180 = vmatpush2.msra.mxu0 0.0
    %181 = vmatprep.subr.mxu0 0.0
    %182 = vmatpush2.msra.mxu0 0.0
    %183 = vmatprep.subr.mxu0 0.0
    %184 = vmatpush2.msra.mxu0 0.0
    %185 = vmatprep.subr.mxu0 0.0
    %186 = vmatpush2.msra.mxu0 0.0
    %187 = vmatprep.mubr.f32.mxu0 0.0
    %188 = vmatmul.mubr.f32.gmra.mxu0 %v99
    %v189 = vpop.f32.mrf.mxu0
    %v190 = vadd.f32 %v121, %v189
    %v191 = vpop.f32.mrf.mxu0
    %192 = vdwg.mxu0
    %v193 = vmul.f32 %v190, 0.01
    %v194 = vmax.f32 %v190, %v193
    %v195 = vtanh.pop %v194
    %v196 = vld [vmem:[#allocation7] sm:$0xff]
    %v197 = vld [vmem:[#allocation7 + $0x8] sm:$0xff]
    %v198 = vld [vmem:[#allocation7 + $0x10] sm:$0xff]
    %v199 = vld [vmem:[#allocation7 + $0x18] sm:$0xff]
    %v200 = vld [vmem:[#allocation7 + $0x20] sm:$0xff]
    %v201 = vld [vmem:[#allocation7 + $0x28] sm:$0xff]
    %v202 = vld [vmem:[#allocation7 + $0x30] sm:$0xff]
    %v203 = vld [vmem:[#allocation7 + $0x38] sm:$0xff]
    %v204 = vld [vmem:[#allocation7 + $0x40] sm:$0xff]
    %v205 = vld [vmem:[#allocation7 + $0x48] sm:$0xff]
    %v206 = vld [vmem:[#allocation7 + $0x50] sm:$0xff]
    %v207 = vld [vmem:[#allocation7 + $0x58] sm:$0xff]
    %v208 = vld [vmem:[#allocation7 + $0x60] sm:$0xff]
    %v209 = vld [vmem:[#allocation7 + $0x68] sm:$0xff]
    %v210 = vld [vmem:[#allocation7 + $0x70] sm:$0xff]
    %v211 = vld [vmem:[#allocation7 + $0x78] sm:$0xff]
    %v212 = vld [vmem:[%s4] sm:$0x1]
    %v214 = vlaneseq
    %v215 = vshrl.u32 %v214, 7
    %v216 = vsub.s32 0, %v215
    %v217 = vrot.slane %v212, %v216
    %219 = vmatprep.subr.mxu0 0.0
    %220 = vmatpush1.msra.mxu0 %v211
    %221 = vmatprep.subr.mxu0 0.0
    %222 = vmatpush1.msra.mxu0 %v210
    %223 = vmatprep.subr.mxu0 0.0
    %224 = vmatpush1.msra.mxu0 %v209
    %225 = vmatprep.subr.mxu0 0.0
    %226 = vmatpush1.msra.mxu0 %v208
    %227 = vmatprep.subr.mxu0 0.0
    %228 = vmatpush1.msra.mxu0 %v207
    %229 = vmatprep.subr.mxu0 0.0
    %230 = vmatpush1.msra.mxu0 %v206
    %231 = vmatprep.subr.mxu0 0.0
    %232 = vmatpush1.msra.mxu0 %v205
    %233 = vmatprep.subr.mxu0 0.0
    %234 = vmatpush1.msra.mxu0 %v204
    %235 = vmatprep.subr.mxu0 0.0
    %236 = vmatpush1.msra.mxu0 %v203
    %237 = vmatprep.subr.mxu0 0.0
    %238 = vmatpush1.msra.mxu0 %v202
    %239 = vmatprep.subr.mxu0 0.0
    %240 = vmatpush1.msra.mxu0 %v201
    %241 = vmatprep.subr.mxu0 0.0
    %242 = vmatpush1.msra.mxu0 %v200
    %243 = vmatprep.subr.mxu0 0.0
    %244 = vmatpush1.msra.mxu0 %v199
    %245 = vmatprep.subr.mxu0 0.0
    %246 = vmatpush1.msra.mxu0 %v198
    %247 = vmatprep.subr.mxu0 0.0
    %248 = vmatpush1.msra.mxu0 %v197
    %249 = vmatprep.subr.mxu0 0.0
    %250 = vmatpush1.msra.mxu0 %v196
    %251 = vmatprep.subr.mxu0 0.0
    %252 = vmatpush2.msra.mxu0 0.0
    %253 = vmatprep.subr.mxu0 0.0
    %254 = vmatpush2.msra.mxu0 0.0
    %255 = vmatprep.subr.mxu0 0.0
    %256 = vmatpush2.msra.mxu0 0.0
    %257 = vmatprep.subr.mxu0 0.0
    %258 = vmatpush2.msra.mxu0 0.0
    %259 = vmatprep.subr.mxu0 0.0
    %260 = vmatpush2.msra.mxu0 0.0
    %261 = vmatprep.subr.mxu0 0.0
    %262 = vmatpush2.msra.mxu0 0.0
    %263 = vmatprep.subr.mxu0 0.0
    %264 = vmatpush2.msra.mxu0 0.0
    %265 = vmatprep.subr.mxu0 0.0
    %266 = vmatpush2.msra.mxu0 0.0
    %267 = vmatprep.subr.mxu0 0.0
    %268 = vmatpush2.msra.mxu0 0.0
    %269 = vmatprep.subr.mxu0 0.0
    %270 = vmatpush2.msra.mxu0 0.0
    %271 = vmatprep.subr.mxu0 0.0
    %272 = vmatpush2.msra.mxu0 0.0
    %273 = vmatprep.subr.mxu0 0.0
    %274 = vmatpush2.msra.mxu0 0.0
    %275 = vmatprep.subr.mxu0 0.0
    %276 = vmatpush2.msra.mxu0 0.0
    %277 = vmatprep.subr.mxu0 0.0
    %278 = vmatpush2.msra.mxu0 0.0
    %279 = vmatprep.subr.mxu0 0.0
    %280 = vmatpush2.msra.mxu0 0.0
    %281 = vmatprep.subr.mxu0 0.0
    %282 = vmatpush2.msra.mxu0 0.0
    %283 = vmatprep.mubr.f32.mxu0 0.0
    %284 = vmatmul.mubr.f32.gmra.mxu0 %v195
    %v285 = vpop.f32.mrf.mxu0
    %v286 = vadd.f32 %v217, %v285
    %v287 = vpop.f32.mrf.mxu0
    %288 = vdwg.mxu0
    %v289 = vmul.f32 %v286, 0.01
    %v290 = vmax.f32 %v286, %v289
    %v291 = vtanh.pop %v290
    %v292 = vld [vmem:[#allocation8] sm:$0xff]
    %v293 = vld [vmem:[#allocation8 + $0x8] sm:$0xff]
    %v294 = vld [vmem:[#allocation8 + $0x10] sm:$0xff]
    %v295 = vld [vmem:[#allocation8 + $0x18] sm:$0xff]
    %v296 = vld [vmem:[#allocation8 + $0x20] sm:$0xff]
    %v297 = vld [vmem:[#allocation8 + $0x28] sm:$0xff]
    %v298 = vld [vmem:[#allocation8 + $0x30] sm:$0xff]
    %v299 = vld [vmem:[#allocation8 + $0x38] sm:$0xff]
    %v300 = vld [vmem:[#allocation8 + $0x40] sm:$0xff]
    %v301 = vld [vmem:[#allocation8 + $0x48] sm:$0xff]
    %v302 = vld [vmem:[#allocation8 + $0x50] sm:$0xff]
    %v303 = vld [vmem:[#allocation8 + $0x58] sm:$0xff]
    %v304 = vld [vmem:[#allocation8 + $0x60] sm:$0xff]
    %v305 = vld [vmem:[#allocation8 + $0x68] sm:$0xff]
    %v306 = vld [vmem:[#allocation8 + $0x70] sm:$0xff]
    %v307 = vld [vmem:[#allocation8 + $0x78] sm:$0xff]
    %v308 = vld [vmem:[%s6] sm:$0x1]
    %v310 = vlaneseq
    %v311 = vshrl.u32 %v310, 7
    %v312 = vsub.s32 0, %v311
    %v313 = vrot.slane %v308, %v312
    %315 = vmatprep.subr.mxu0 0.0
    %316 = vmatpush1.msra.mxu0 %v307
    %317 = vmatprep.subr.mxu0 0.0
    %318 = vmatpush1.msra.mxu0 %v306
    %319 = vmatprep.subr.mxu0 0.0
    %320 = vmatpush1.msra.mxu0 %v305
    %321 = vmatprep.subr.mxu0 0.0
    %322 = vmatpush1.msra.mxu0 %v304
    %323 = vmatprep.subr.mxu0 0.0
    %324 = vmatpush1.msra.mxu0 %v303
    %325 = vmatprep.subr.mxu0 0.0
    %326 = vmatpush1.msra.mxu0 %v302
    %327 = vmatprep.subr.mxu0 0.0
    %328 = vmatpush1.msra.mxu0 %v301
    %329 = vmatprep.subr.mxu0 0.0
    %330 = vmatpush1.msra.mxu0 %v300
    %331 = vmatprep.subr.mxu0 0.0
    %332 = vmatpush1.msra.mxu0 %v299
    %333 = vmatprep.subr.mxu0 0.0
    %334 = vmatpush1.msra.mxu0 %v298
    %335 = vmatprep.subr.mxu0 0.0
    %336 = vmatpush1.msra.mxu0 %v297
    %337 = vmatprep.subr.mxu0 0.0
    %338 = vmatpush1.msra.mxu0 %v296
    %339 = vmatprep.subr.mxu0 0.0
    %340 = vmatpush1.msra.mxu0 %v295
    %341 = vmatprep.subr.mxu0 0.0
    %342 = vmatpush1.msra.mxu0 %v294
    %343 = vmatprep.subr.mxu0 0.0
    %344 = vmatpush1.msra.mxu0 %v293
    %345 = vmatprep.subr.mxu0 0.0
    %346 = vmatpush1.msra.mxu0 %v292
    %347 = vmatprep.subr.mxu0 0.0
    %348 = vmatpush2.msra.mxu0 0.0
    %349 = vmatprep.subr.mxu0 0.0
    %350 = vmatpush2.msra.mxu0 0.0
    %351 = vmatprep.subr.mxu0 0.0
    %352 = vmatpush2.msra.mxu0 0.0
    %353 = vmatprep.subr.mxu0 0.0
    %354 = vmatpush2.msra.mxu0 0.0
    %355 = vmatprep.subr.mxu0 0.0
    %356 = vmatpush2.msra.mxu0 0.0
    %357 = vmatprep.subr.mxu0 0.0
    %358 = vmatpush2.msra.mxu0 0.0
    %359 = vmatprep.subr.mxu0 0.0
    %360 = vmatpush2.msra.mxu0 0.0
    %361 = vmatprep.subr.mxu0 0.0
    %362 = vmatpush2.msra.mxu0 0.0
    %363 = vmatprep.subr.mxu0 0.0
    %364 = vmatpush2.msra.mxu0 0.0
    %365 = vmatprep.subr.mxu0 0.0
    %366 = vmatpush2.msra.mxu0 0.0
    %367 = vmatprep.subr.mxu0 0.0
    %368 = vmatpush2.msra.mxu0 0.0
    %369 = vmatprep.subr.mxu0 0.0
    %370 = vmatpush2.msra.mxu0 0.0
    %371 = vmatprep.subr.mxu0 0.0
    %372 = vmatpush2.msra.mxu0 0.0
    %373 = vmatprep.subr.mxu0 0.0
    %374 = vmatpush2.msra.mxu0 0.0
    %375 = vmatprep.subr.mxu0 0.0
    %376 = vmatpush2.msra.mxu0 0.0
    %377 = vmatprep.subr.mxu0 0.0
    %378 = vmatpush2.msra.mxu0 0.0
    %379 = vmatprep.mubr.f32.mxu0 0.0
    %380 = vmatmul.mubr.f32.gmra.mxu0 %v291
    %v381 = vpop.f32.mrf.mxu0
    %v382 = vadd.f32 %v313, %v381
    %v383 = vpop.f32.mrf.mxu0
    %384 = vdwg.mxu0
    %v385 = vmul.f32 %v382, 0.01
    %v386 = vmax.f32 %v382, %v385
    %v387 = vtanh.pop %v386
    %v388 = vld [vmem:[#allocation10] sm:$0xff]
    %v389 = vld [vmem:[#allocation10 + $0x8] sm:$0xff]
    %v390 = vld [vmem:[#allocation10 + $0x10] sm:$0xff]
    %v391 = vld [vmem:[#allocation10 + $0x18] sm:$0xff]
    %v392 = vld [vmem:[#allocation10 + $0x20] sm:$0xff]
    %v393 = vld [vmem:[#allocation10 + $0x28] sm:$0xff]
    %v394 = vld [vmem:[#allocation10 + $0x30] sm:$0xff]
    %v395 = vld [vmem:[#allocation10 + $0x38] sm:$0xff]
    %v396 = vld [vmem:[#allocation10 + $0x40] sm:$0xff]
    %v397 = vld [vmem:[#allocation10 + $0x48] sm:$0xff]
    %v398 = vld [vmem:[#allocation10 + $0x50] sm:$0xff]
    %v399 = vld [vmem:[#allocation10 + $0x58] sm:$0xff]
    %v400 = vld [vmem:[#allocation10 + $0x60] sm:$0xff]
    %v401 = vld [vmem:[#allocation10 + $0x68] sm:$0xff]
    %v402 = vld [vmem:[#allocation10 + $0x70] sm:$0xff]
    %v403 = vld [vmem:[#allocation10 + $0x78] sm:$0xff]
    %v404 = vld [vmem:[%s8] sm:$0x1]
    %v406 = vlaneseq
    %v407 = vshrl.u32 %v406, 7
    %v408 = vsub.s32 0, %v407
    %v409 = vrot.slane %v404, %v408
    %411 = vmatprep.subr.mxu0 0.0
    %412 = vmatpush1.msra.mxu0 %v403
    %413 = vmatprep.subr.mxu0 0.0
    %414 = vmatpush1.msra.mxu0 %v402
    %415 = vmatprep.subr.mxu0 0.0
    %416 = vmatpush1.msra.mxu0 %v401
    %417 = vmatprep.subr.mxu0 0.0
    %418 = vmatpush1.msra.mxu0 %v400
    %419 = vmatprep.subr.mxu0 0.0
    %420 = vmatpush1.msra.mxu0 %v399
    %421 = vmatprep.subr.mxu0 0.0
    %422 = vmatpush1.msra.mxu0 %v398
    %423 = vmatprep.subr.mxu0 0.0
    %424 = vmatpush1.msra.mxu0 %v397
    %425 = vmatprep.subr.mxu0 0.0
    %426 = vmatpush1.msra.mxu0 %v396
    %427 = vmatprep.subr.mxu0 0.0
    %428 = vmatpush1.msra.mxu0 %v395
    %429 = vmatprep.subr.mxu0 0.0
    %430 = vmatpush1.msra.mxu0 %v394
    %431 = vmatprep.subr.mxu0 0.0
    %432 = vmatpush1.msra.mxu0 %v393
    %433 = vmatprep.subr.mxu0 0.0
    %434 = vmatpush1.msra.mxu0 %v392
    %435 = vmatprep.subr.mxu0 0.0
    %436 = vmatpush1.msra.mxu0 %v391
    %437 = vmatprep.subr.mxu0 0.0
    %438 = vmatpush1.msra.mxu0 %v390
    %439 = vmatprep.subr.mxu0 0.0
    %440 = vmatpush1.msra.mxu0 %v389
    %441 = vmatprep.subr.mxu0 0.0
    %442 = vmatpush1.msra.mxu0 %v388
    %443 = vmatprep.subr.mxu0 0.0
    %444 = vmatpush2.msra.mxu0 0.0
    %445 = vmatprep.subr.mxu0 0.0
    %446 = vmatpush2.msra.mxu0 0.0
    %447 = vmatprep.subr.mxu0 0.0
    %448 = vmatpush2.msra.mxu0 0.0
    %449 = vmatprep.subr.mxu0 0.0
    %450 = vmatpush2.msra.mxu0 0.0
    %451 = vmatprep.subr.mxu0 0.0
    %452 = vmatpush2.msra.mxu0 0.0
    %453 = vmatprep.subr.mxu0 0.0
    %454 = vmatpush2.msra.mxu0 0.0
    %455 = vmatprep.subr.mxu0 0.0
    %456 = vmatpush2.msra.mxu0 0.0
    %457 = vmatprep.subr.mxu0 0.0
    %458 = vmatpush2.msra.mxu0 0.0
    %459 = vmatprep.subr.mxu0 0.0
    %460 = vmatpush2.msra.mxu0 0.0
    %461 = vmatprep.subr.mxu0 0.0
    %462 = vmatpush2.msra.mxu0 0.0
    %463 = vmatprep.subr.mxu0 0.0
    %464 = vmatpush2.msra.mxu0 0.0
    %465 = vmatprep.subr.mxu0 0.0
    %466 = vmatpush2.msra.mxu0 0.0
    %467 = vmatprep.subr.mxu0 0.0
    %468 = vmatpush2.msra.mxu0 0.0
    %469 = vmatprep.subr.mxu0 0.0
    %470 = vmatpush2.msra.mxu0 0.0
    %471 = vmatprep.subr.mxu0 0.0
    %472 = vmatpush2.msra.mxu0 0.0
    %473 = vmatprep.subr.mxu0 0.0
    %474 = vmatpush2.msra.mxu0 0.0
    %475 = vmatprep.mubr.f32.mxu0 0.0
    %476 = vmatmul.mubr.f32.gmra.mxu0 %v387
    %v477 = vpop.f32.mrf.mxu0
    %v478 = vadd.f32 %v409, %v477
    %v479 = vpop.f32.mrf.mxu0
    %480 = vdwg.mxu0
    %481 = vst [vmem:[#allocation11] sm:$0xff] %v478
    // Predicated region
    $region58: #{tpu_custom_call.1} parent=1 // pred_check
      _
    $region59: #{tpu_custom_call.1} parent=1 // pred_check_branch
      %483 = sbr.rel (0) target = $region61
    $region60: #{tpu_custom_call.1} parent=1 // pred_region
      %s485 = ssub.s32 128, 128
      %486 = vsyncadd [#allocation4], %s485
      %s488 = sshll.u32 [#allocation11], 4
      %s489 = int_to_ptr.vmem [resolvable:$true] %s488
      %491 = dma.vmem_to_hbm [thread:$0]  %s489, 128, %s9, [#allocation4]
    $region61: #{tpu_custom_call.1} parent=1 // pred_fallthru
      _
    // Predicated region
    $region62: #{tpu_custom_call.1} parent=1 // pred_check
      _
    $region63: #{tpu_custom_call.1} parent=1 // pred_check_branch
      %493 = sbr.rel (0) target = $region65
    $region64: #{tpu_custom_call.1} parent=1 // pred_region
      %494 = dma.done [#allocation4], 128
    $region65: #{tpu_custom_call.1} parent=1 // pred_fallthru
      _
    %495 = vsyncpa [#allocation3], 1
    %496 = vsyncpa [#allocation6], 1
    %497 = vsyncpa [#allocation9], 1
    %498 = vsyncpa [#allocation4], 1

</llo_original>
